<compile_context>
chip_gen: v6e
topology: v6e:2x2x1
jax: 0.10.0
libtpu: 0.0.40
codegen_flags: <defaults>
</compile_context>

<pallas_src>
import jax
import jax.numpy as jnp
from jax.experimental import pallas as pl
from jax.experimental.pallas import tpu as pltpu


_TR_MAX = 2048  # rows (of 128 points) per grid step:
                # in 2048*256*4 B (2 MiB) + out 2048*128*4 B (1 MiB) ~= 3 MiB/step;
                # double-buffered VMEM ~6.3 MiB + 128 KiB weights.


def _affine_slab_kernel(x_ref, m_ref, b_ref, o_ref):
    # x_ref: (tr, 256)  -- 128 points per row, lanes interleaved [x0,x1,x0,x1,...]
    # m_ref: (256, 128) -- de-interleave + collapsed-weight matrix (VMEM resident)
    # b_ref: (1, 1)     -- collapsed bias (SMEM scalar)
    # o_ref: (tr, 128)  -- lane-dense output: point k of row r at lane k
    acc = jnp.dot(x_ref[...], m_ref[...], preferred_element_type=jnp.float32)
    o_ref[...] = (acc + b_ref[0, 0]).astype(o_ref.dtype)


def circle_model_v1(x, params):
    """x: (N, 2) float32 -> (N, 1) float32."""
    w1, b1, w2, b2, w3, b3 = params

    # Exact algebraic collapse of the activation-free 3-layer MLP (wrapper side,
    # tiny). NOTE: valid only because there are no activations between layers.
    w_eff = (w1 @ w2 @ w3).astype(jnp.float32)               # (2, 1)
    b_eff = ((b1 @ w2 + b2) @ w3 + b3).astype(jnp.float32)   # (1, 1)

    n = x.shape[0]
    # Pad only up to a multiple of 128 points (required for the free (R, 256)
    # view) and keep at least 8 rows so all blocks stay (8, 128)-aligned.
    # For 128-aligned large batches this is a no-op (no extra HBM pass).
    n_pad = max(pl.cdiv(n, 128) * 128, 1024)
    if n_pad != n:
        x = jnp.pad(x, ((0, n_pad - n), (0, 0)))
    r = n_pad // 128
    x2 = x.reshape(r, 256)  # free contiguous view: no HBM transpose pass

    # Selection-weight matrix: column k picks lanes (2k, 2k+1) with (w0, w1).
    m = jnp.kron(jnp.eye(128, dtype=jnp.float32), w_eff)     # (256, 128)

    # Row tile: multiple of 8, capped at _TR_MAX, aiming for >= 2 grid steps
    # when there is enough work (keeps both v7x TensorCores streaming).
    tr = min(_TR_MAX, max(8, (((r + 1) // 2) // 8) * 8))
    grid = (pl.cdiv(r, tr),)

    out2 = pl.pallas_call(
        _affine_slab_kernel,
        out_shape=jax.ShapeDtypeStruct((r, 128), jnp.float32),
        grid=grid,
        in_specs=[
            pl.BlockSpec((tr, 256), lambda i: (i, 0)),             # streamed slabs
            pl.BlockSpec((256, 128), lambda i: (0, 0)),            # resident weights
            pl.BlockSpec(memory_space=pltpu.MemorySpace.SMEM),     # bias scalar
        ],
        out_specs=pl.BlockSpec((tr, 128), lambda i: (i, 0)),
        compiler_params=pltpu.CompilerParams(
            dimension_semantics=("parallel",)),
    )(x2, m, b_eff)

    # Free reshape back to (N_pad, 1); slice away padding (no-op when aligned).
    return out2.reshape(n_pad, 1)[:n]


def init_params(key):
    """Deterministic synthetic parameters matching CircleModelV1 shapes.

    Weights stored as (in_features, out_features) relative to PyTorch's
    (out, in) layout:
      linear_layer1: W (2, 10),  b (1, 10)
      linear_layer2: W (10, 10), b (1, 10)
      linear_layer3: W (10, 1),  b (1, 1)
    """
    k1, k2, k3, k4, k5, k6 = jax.random.split(key, 6)
    w1 = jax.random.normal(k1, (2, 10), jnp.float32) * 0.5
    b1 = jax.random.normal(k2, (1, 10), jnp.float32) * 0.1
    w2 = jax.random.normal(k3, (10, 10), jnp.float32) * 0.3
    b2 = jax.random.normal(k4, (1, 10), jnp.float32) * 0.1
    w3 = jax.random.normal(k5, (10, 1), jnp.float32) * 0.3
    b3 = jax.random.normal(k6, (1, 1), jnp.float32) * 0.1
    return (w1, b1, w2, b2, w3, b3)


def _reference(x, params):
    w1, b1, w2, b2, w3, b3 = params
    h1 = x @ w1 + b1
    h2 = h1 @ w2 + b2
    return h2 @ w3 + b3


if __name__ == "__main__":
    key = jax.random.PRNGKey(0)
    pkey, xkey = jax.random.split(key)
    params = init_params(pkey)

    # Small batch of 2-D "circle" points, consistent with Linear(2, 10) input.
    x = jax.random.normal(xkey, (8, 2), jnp.float32)

    out = circle_model_v1(x, params)
    out = jax.block_until_ready(out)

    ref = _reference(x, params)
    assert out.shape == (8, 1), out.shape
    assert jnp.allclose(out, ref, atol=1e-4, rtol=1e-4), "mismatch vs JAX reference"

    print("KERNEL_OK")
</pallas_src>

<mosaic_0001>
module attributes {stable_mosaic.version = 11 : i64} {
  func.func @_affine_slab_kernel(%arg0: i32, %arg1: memref<8x256xf32, #tpu.memory_space<vmem>>, %arg2: memref<256x128xf32, #tpu.memory_space<vmem>>, %arg3: memref<1x1xf32, #tpu.memory_space<smem>>, %arg4: memref<8x128xf32, #tpu.memory_space<vmem>>) attributes {dimension_semantics = [#tpu.dimension_semantics<parallel>], iteration_bounds = array<i64: 1>, scalar_prefetch = 0 : i64, scratch_operands = 0 : i64, tpu.core_type = #tpu.core_type<tc>, window_params = [{transform_indices = @transform_0, window_bounds = array<i64: 8, 256>}, {pipeline_mode = #tpu.pipeline_mode<synchronous>, transform_indices = @transform_1, window_bounds = array<i64: 256, 128>}, {transform_indices = @transform_2, window_bounds = array<i64: 1, 1>}, {transform_indices = @transform_3, window_bounds = array<i64: 8, 128>}]} {
    %c0 = arith.constant 0 : index
    %c0_0 = arith.constant 0 : index
    %0 = vector.load %arg1[%c0, %c0_0] : memref<8x256xf32, #tpu.memory_space<vmem>>, vector<8x256xf32>
    %c0_1 = arith.constant 0 : index
    %c0_2 = arith.constant 0 : index
    %1 = vector.load %arg2[%c0_1, %c0_2] : memref<256x128xf32, #tpu.memory_space<vmem>>, vector<256x128xf32>
    %cst = arith.constant dense<0.000000e+00> : vector<8x128xf32>
    %2 = tpu.matmul %0, %1, %cst {dimension_numbers = #tpu.dot_dimension_numbers<[1], [0], [0], [1], [0, 0, 1, 1], [], []>} : vector<8x256xf32>, vector<256x128xf32>, vector<8x128xf32> -> vector<8x128xf32>
    %c0_3 = arith.constant 0 : index
    %c0_4 = arith.constant 0 : index
    %3 = memref.load %arg3[%c0_3, %c0_4] : memref<1x1xf32, #tpu.memory_space<smem>>
    %4 = vector.broadcast %3 : f32 to vector<8x128xf32>
    %5 = arith.addf %2, %4 : vector<8x128xf32>
    %c0_5 = arith.constant 0 : index
    %c0_6 = arith.constant 0 : index
    %6 = vector.load %arg4[%c0_5, %c0_6] : memref<8x128xf32, #tpu.memory_space<vmem>>, vector<8x128xf32>
    tpu.vector_store %arg4[%c0_5, %c0_6], %5 {strides = array<i32>} : memref<8x128xf32, #tpu.memory_space<vmem>>, vector<8x128xf32>,
    return
  }
  func.func @transform_0(%arg0: i32) -> (i32, i32) {
    %c0_i32 = arith.constant 0 : i32
    %c0_i32_0 = arith.constant 0 : i32
    return %arg0, %c0_i32 : i32, i32
  }
  func.func @transform_1(%arg0: i32) -> (i32, i32) {
    %c0_i32 = arith.constant 0 : i32
    %c0_i32_0 = arith.constant 0 : i32
    %c0_i32_1 = arith.constant 0 : i32
    return %c0_i32, %c0_i32_0 : i32, i32
  }
  func.func @transform_2(%arg0: i32) -> (i32, i32) {
    %c0_i32 = arith.constant 0 : i32
    %c0_i32_0 = arith.constant 0 : i32
    %c0_i32_1 = arith.constant 0 : i32
    return %c0_i32, %c0_i32_0 : i32, i32
  }
  func.func @transform_3(%arg0: i32) -> (i32, i32) {
    %c0_i32 = arith.constant 0 : i32
    %c0_i32_0 = arith.constant 0 : i32
    return %arg0, %c0_i32 : i32, i32
  }
}

</mosaic_0001>

<llo_original>
// kernel: tpu_custom_call.1
$region0: #{tpu_custom_call.1}
  #allocation0 [shape = 'u32[]', space=smem, size = 0x4, offset = 0x4, fixed_abs, tag = 'smem constant byte address 0x4 - core index']
  #allocation1 [shape = 'u32[144,128]{1,0:T(1,128)}', space=vmem, size = 0x12000, scoped, tag = 'internal scratch']
  #allocation2 [shape = 'f32[1,1]{1,0:T(1,128)S(6)}', space=smem, size = 0x200, scoped, tag = 'scoped memory for tpu_custom_call.1']
  %s0 = inlined_call_operand.hbm [shape: f32[8,256], index: 0, kind: input, shape index: {}]
  %s1 = inlined_call_operand.hbm [shape: f32[256,128], index: 1, kind: input, shape index: {}]
  %s2 = inlined_call_operand.<no memory space> [shape: f32[1,1], index: 2, kind: input, shape index: {}]
  %s3 = inlined_call_operand.hbm [shape: f32[8,128], index: 3, kind: output, shape index: {}]
  %s4 = sld [smem:[#allocation0]]
  $region30: #{tpu_custom_call.1} parent=0
    _
  %s6 = ssub.s32 1, %s4
  %s7 = scalar_select 0, %s6, %s4
  %8 = sst [smem:[#allocation2]] %s2
  $region1: #{tpu_custom_call.1} parent=0
    #allocation3 [shape = 'u8[8192]{0}', space=vmem, size = 0x2000, scoped, tag = 'input window, operand 0, single buffered']
    #allocation4 [shape = 's32[1]{0}', space=sflag, size = 0x4, scoped, tag = 'scoped memory for tpu_custom_call.1']
    #allocation5 [shape = 's32[1]{0}', space=sflag, size = 0x4, scoped, tag = 'scoped memory for tpu_custom_call.1']
    #allocation6 [shape = 'u8[131072]{0}', space=vmem, size = 0x20000, scoped, tag = 'input window, operand 1, single buffered']
    #allocation7 [shape = 's32[1]{0}', space=sflag, size = 0x4, scoped, tag = 'scoped memory for tpu_custom_call.1']
    #allocation8 [shape = 'u8[4096]{0}', space=vmem, size = 0x1000, scoped, tag = 'output window, operand 0, single buffered']
    %9 = vsyncpa [#allocation4], 0
    %10 = vsyncpa [#allocation7], 0
    %11 = vsyncpa [#allocation5], 0
    // Predicated region
    $region2: #{tpu_custom_call.1} parent=1 // pred_check
      _
    $region3: #{tpu_custom_call.1} parent=1 // pred_check_branch
      %13 = sbr.rel (0) target = $region5
    $region4: #{tpu_custom_call.1} parent=1 // pred_region
      %s15 = ssub.s32 256, 256
      %16 = vsyncadd [#allocation4], %s15
      %s18 = sshll.u32 [#allocation3], 4
      %s19 = int_to_ptr.vmem [resolvable:$true] %s18
      %21 = dma.hbm_to_vmem [thread:$0]  %s0, 256, %s19, [#allocation4]
    $region5: #{tpu_custom_call.1} parent=1 // pred_fallthru
      _
    // Predicated region
    $region6: #{tpu_custom_call.1} parent=1 // pred_check
      _
    $region7: #{tpu_custom_call.1} parent=1 // pred_check_branch
      %23 = sbr.rel (0) target = $region9
    $region8: #{tpu_custom_call.1} parent=1 // pred_region
      %s25 = ssub.s32 4096, 4096
      %26 = vsyncadd [#allocation7], %s25
      %s27 = sshll.u32 [#allocation6], 4
      %s28 = int_to_ptr.vmem [resolvable:$true] %s27
      %33 = dma.hbm_to_vmem [thread:$0]  %s1, 4096, %s28, [#allocation7], 128, 128, 8
    $region9: #{tpu_custom_call.1} parent=1 // pred_fallthru
      _
    // Predicated region
    $region10: #{tpu_custom_call.1} parent=1 // pred_check
      _
    $region11: #{tpu_custom_call.1} parent=1 // pred_check_branch
      %35 = sbr.rel (0) target = $region13
    $region12: #{tpu_custom_call.1} parent=1 // pred_region
      _
    $region13: #{tpu_custom_call.1} parent=1 // pred_fallthru
      _
    // Predicated region
    $region14: #{tpu_custom_call.1} parent=1 // pred_check
      _
    $region15: #{tpu_custom_call.1} parent=1 // pred_check_branch
      %37 = sbr.rel (0) target = $region17
    $region16: #{tpu_custom_call.1} parent=1 // pred_region
      %38 = dma.done [#allocation4], 256
    $region17: #{tpu_custom_call.1} parent=1 // pred_fallthru
      _
    // Predicated region
    $region18: #{tpu_custom_call.1} parent=1 // pred_check
      _
    $region19: #{tpu_custom_call.1} parent=1 // pred_check_branch
      %40 = sbr.rel (0) target = $region21
    $region20: #{tpu_custom_call.1} parent=1 // pred_region
      %41 = dma.done [#allocation7], 4096
    $region21: #{tpu_custom_call.1} parent=1 // pred_fallthru
      _
    %v42 = vld [vmem:[#allocation3] sm:$0xff]
    %v43 = vld [vmem:[#allocation3 + $0x8] sm:$0xff]
    %v44 = vld [vmem:[#allocation6] sm:$0xff]
    %v45 = vld [vmem:[#allocation6 + $0x8] sm:$0xff]
    %v46 = vld [vmem:[#allocation6 + $0x10] sm:$0xff]
    %v47 = vld [vmem:[#allocation6 + $0x18] sm:$0xff]
    %v48 = vld [vmem:[#allocation6 + $0x20] sm:$0xff]
    %v49 = vld [vmem:[#allocation6 + $0x28] sm:$0xff]
    %v50 = vld [vmem:[#allocation6 + $0x30] sm:$0xff]
    %v51 = vld [vmem:[#allocation6 + $0x38] sm:$0xff]
    %v52 = vld [vmem:[#allocation6 + $0x40] sm:$0xff]
    %v53 = vld [vmem:[#allocation6 + $0x48] sm:$0xff]
    %v54 = vld [vmem:[#allocation6 + $0x50] sm:$0xff]
    %v55 = vld [vmem:[#allocation6 + $0x58] sm:$0xff]
    %v56 = vld [vmem:[#allocation6 + $0x60] sm:$0xff]
    %v57 = vld [vmem:[#allocation6 + $0x68] sm:$0xff]
    %v58 = vld [vmem:[#allocation6 + $0x70] sm:$0xff]
    %v59 = vld [vmem:[#allocation6 + $0x78] sm:$0xff]
    %v60 = vld [vmem:[#allocation6 + $0x80] sm:$0xff]
    %v61 = vld [vmem:[#allocation6 + $0x88] sm:$0xff]
    %v62 = vld [vmem:[#allocation6 + $0x90] sm:$0xff]
    %v63 = vld [vmem:[#allocation6 + $0x98] sm:$0xff]
    %v64 = vld [vmem:[#allocation6 + $0xa0] sm:$0xff]
    %v65 = vld [vmem:[#allocation6 + $0xa8] sm:$0xff]
    %v66 = vld [vmem:[#allocation6 + $0xb0] sm:$0xff]
    %v67 = vld [vmem:[#allocation6 + $0xb8] sm:$0xff]
    %v68 = vld [vmem:[#allocation6 + $0xc0] sm:$0xff]
    %v69 = vld [vmem:[#allocation6 + $0xc8] sm:$0xff]
    %v70 = vld [vmem:[#allocation6 + $0xd0] sm:$0xff]
    %v71 = vld [vmem:[#allocation6 + $0xd8] sm:$0xff]
    %v72 = vld [vmem:[#allocation6 + $0xe0] sm:$0xff]
    %v73 = vld [vmem:[#allocation6 + $0xe8] sm:$0xff]
    %v74 = vld [vmem:[#allocation6 + $0xf0] sm:$0xff]
    %v75 = vld [vmem:[#allocation6 + $0xf8] sm:$0xff]
    %s76 = sld [smem:[#allocation2]]
    %v77 = vstv %s76
    %78 = vmatprep.subr.mxu0 0.0
    %79 = vmatpush1.msra.mxu0 %v59
    %80 = vmatprep.subr.mxu0 0.0
    %81 = vmatpush1.msra.mxu0 %v58
    %82 = vmatprep.subr.mxu0 0.0
    %83 = vmatpush1.msra.mxu0 %v57
    %84 = vmatprep.subr.mxu0 0.0
    %85 = vmatpush1.msra.mxu0 %v56
    %86 = vmatprep.subr.mxu0 0.0
    %87 = vmatpush1.msra.mxu0 %v55
    %88 = vmatprep.subr.mxu0 0.0
    %89 = vmatpush1.msra.mxu0 %v54
    %90 = vmatprep.subr.mxu0 0.0
    %91 = vmatpush1.msra.mxu0 %v53
    %92 = vmatprep.subr.mxu0 0.0
    %93 = vmatpush1.msra.mxu0 %v52
    %94 = vmatprep.subr.mxu0 0.0
    %95 = vmatpush1.msra.mxu0 %v51
    %96 = vmatprep.subr.mxu0 0.0
    %97 = vmatpush1.msra.mxu0 %v50
    %98 = vmatprep.subr.mxu0 0.0
    %99 = vmatpush1.msra.mxu0 %v49
    %100 = vmatprep.subr.mxu0 0.0
    %101 = vmatpush1.msra.mxu0 %v48
    %102 = vmatprep.subr.mxu0 0.0
    %103 = vmatpush1.msra.mxu0 %v47
    %104 = vmatprep.subr.mxu0 0.0
    %105 = vmatpush1.msra.mxu0 %v46
    %106 = vmatprep.subr.mxu0 0.0
    %107 = vmatpush1.msra.mxu0 %v45
    %108 = vmatprep.subr.mxu0 0.0
    %109 = vmatpush1.msra.mxu0 %v44
    %110 = vmatprep.subr.mxu0 0.0
    %111 = vmatpush2.msra.mxu0 %v75
    %112 = vmatprep.subr.mxu0 0.0
    %113 = vmatpush2.msra.mxu0 %v74
    %114 = vmatprep.subr.mxu0 0.0
    %115 = vmatpush2.msra.mxu0 %v73
    %116 = vmatprep.subr.mxu0 0.0
    %117 = vmatpush2.msra.mxu0 %v72
    %118 = vmatprep.subr.mxu0 0.0
    %119 = vmatpush2.msra.mxu0 %v71
    %120 = vmatprep.subr.mxu0 0.0
    %121 = vmatpush2.msra.mxu0 %v70
    %122 = vmatprep.subr.mxu0 0.0
    %123 = vmatpush2.msra.mxu0 %v69
    %124 = vmatprep.subr.mxu0 0.0
    %125 = vmatpush2.msra.mxu0 %v68
    %126 = vmatprep.subr.mxu0 0.0
    %127 = vmatpush2.msra.mxu0 %v67
    %128 = vmatprep.subr.mxu0 0.0
    %129 = vmatpush2.msra.mxu0 %v66
    %130 = vmatprep.subr.mxu0 0.0
    %131 = vmatpush2.msra.mxu0 %v65
    %132 = vmatprep.subr.mxu0 0.0
    %133 = vmatpush2.msra.mxu0 %v64
    %134 = vmatprep.subr.mxu0 0.0
    %135 = vmatpush2.msra.mxu0 %v63
    %136 = vmatprep.subr.mxu0 0.0
    %137 = vmatpush2.msra.mxu0 %v62
    %138 = vmatprep.subr.mxu0 0.0
    %139 = vmatpush2.msra.mxu0 %v61
    %140 = vmatprep.subr.mxu0 0.0
    %141 = vmatpush2.msra.mxu0 %v60
    %142 = vmatprep.mubr.f32.mxu0 %v43
    %143 = vmatmul.mubr.f32.gmra.mxu0 %v42
    %v144 = vpop.f32.mrf.mxu0
    %v145 = vadd.f32 %v77, %v144
    %v146 = vpop.f32.mrf.mxu0
    %147 = vdwg.mxu0
    %148 = vst [vmem:[#allocation8] sm:$0xff] %v145
    // Predicated region
    $region22: #{tpu_custom_call.1} parent=1 // pred_check
      _
    $region23: #{tpu_custom_call.1} parent=1 // pred_check_branch
      %150 = sbr.rel (0) target = $region25
    $region24: #{tpu_custom_call.1} parent=1 // pred_region
      %s152 = ssub.s32 128, 128
      %153 = vsyncadd [#allocation5], %s152
      %s155 = sshll.u32 [#allocation8], 4
      %s156 = int_to_ptr.vmem [resolvable:$true] %s155
      %158 = dma.vmem_to_hbm [thread:$0]  %s156, 128, %s3, [#allocation5]
    $region25: #{tpu_custom_call.1} parent=1 // pred_fallthru
      _
    // Predicated region
    $region26: #{tpu_custom_call.1} parent=1 // pred_check
      _
    $region27: #{tpu_custom_call.1} parent=1 // pred_check_branch
      %160 = sbr.rel (0) target = $region29
    $region28: #{tpu_custom_call.1} parent=1 // pred_region
      %161 = dma.done [#allocation5], 128
    $region29: #{tpu_custom_call.1} parent=1 // pred_fallthru
      _
    %162 = vsyncpa [#allocation4], 1
    %163 = vsyncpa [#allocation7], 1
    %164 = vsyncpa [#allocation5], 1

</llo_original>
